<compile_context>
chip_gen: v7x
topology: tpu7x:2x2x1
jax: 0.10.0
libtpu: 0.0.40
codegen_flags: <defaults>
</compile_context>

<pallas_src>
import jax
import jax.numpy as jnp
from jax.experimental import pallas as pl
from jax.experimental.pallas import tpu as pltpu


def _round_up(x, m):
    return ((x + m - 1) // m) * m


def _gather_kernel(labels_ref, table_ref, out_ref):
    # labels_ref: scalar-prefetch SMEM ref, full [B_pad] int32 label vector
    # table_ref:  (V, H_pad) VMEM-resident embedding table (constant block idx)
    # out_ref:    (TB, H_pad) VMEM output tile for this batch tile
    tb = out_ref.shape[0]
    base = pl.program_id(0) * tb

    def body(r, carry):
        idx = labels_ref[base + r]                      # SMEM scalar read
        out_ref[pl.ds(r, 1), :] = table_ref[pl.ds(idx, 1), :]
        return carry

    jax.lax.fori_loop(0, tb, body, 0)


def embedding_lookup(labels, table, *, tile_b=128):
    """Pallas gather: embeddings[i] = table[labels[i]]."""
    B = labels.shape[0]
    V, H = table.shape

    # Clamp to valid rows (avoids OOB reads for bad labels).
    labels = jnp.clip(labels.astype(jnp.int32), 0, V - 1)

    # Pad hidden to a multiple of 128 (lane) and batch to a multiple of the
    # batch tile (TB, itself a multiple of 8 -> sublane-dense f32 tiles).
    H_pad = _round_up(H, 128)
    TB = min(tile_b, _round_up(max(B, 1), 8))
    B_pad = _round_up(B, TB)

    if H_pad != H:
        table = jnp.pad(table, ((0, 0), (0, H_pad - H)))
    if B_pad != B:
        labels = jnp.pad(labels, (0, B_pad - B))

    grid = (B_pad // TB,)

    # VMEM budget: resident table (assume double-buffered) + output tiles.
    itemsize = jnp.dtype(table.dtype).itemsize
    vmem_estimate = 2 * V * H_pad * itemsize + 2 * TB * H_pad * itemsize + (1 << 20)
    compiler_params = pltpu.CompilerParams(
        dimension_semantics=("parallel",),
        vmem_limit_bytes=vmem_estimate if vmem_estimate > (32 << 20) else None,
    )

    grid_spec = pltpu.PrefetchScalarGridSpec(
        num_scalar_prefetch=1,
        grid=grid,
        in_specs=[
            # Full table, constant block index -> stays resident in VMEM.
            pl.BlockSpec((V, H_pad), lambda i, labels_ref: (0, 0)),
        ],
        out_specs=pl.BlockSpec((TB, H_pad), lambda i, labels_ref: (i, 0)),
    )

    out = pl.pallas_call(
        _gather_kernel,
        out_shape=jax.ShapeDtypeStruct((B_pad, H_pad), table.dtype),
        grid_spec=grid_spec,
        compiler_params=compiler_params,
    )(labels, table)

    return out[:B, :H]


class LabelEmbedder:
    """JAX/Pallas port of the PyTorch LabelEmbedder."""

    def __init__(self, num_classes, hidden_size, dropout_prob, *, key):
        use_cfg_embedding = int(dropout_prob > 0)
        # nn.Embedding default init is N(0, 1); deterministic synthetic init.
        # (Table kept in float32 to match PyTorch semantics; bf16 is a drop-in
        # option if downstream consumers accept it.)
        self.embedding_table = jax.random.normal(
            key, (num_classes + use_cfg_embedding, hidden_size), dtype=jnp.float32
        )
        self.num_classes = num_classes
        self.dropout_prob = dropout_prob

    def token_drop(self, labels, drop_key, force_drop_ids=None):
        if force_drop_ids is None:
            drop_ids = (
                jax.random.uniform(drop_key, (labels.shape[0],)) < self.dropout_prob
            )
        else:
            drop_ids = force_drop_ids == 1
        return jnp.where(drop_ids, self.num_classes, labels)

    def __call__(self, labels, train, drop_key=None, force_drop_ids=None):
        use_dropout = self.dropout_prob > 0
        if (train and use_dropout) or (force_drop_ids is not None):
            labels = self.token_drop(labels, drop_key, force_drop_ids)
        return embedding_lookup(labels, self.embedding_table)


if __name__ == "__main__":
    num_classes = 10
    hidden_size = 128
    dropout_prob = 0.1
    batch = 8

    root = jax.random.PRNGKey(0)
    k_table, k_labels, k_drop = jax.random.split(root, 3)

    embedder = LabelEmbedder(num_classes, hidden_size, dropout_prob, key=k_table)
    labels = jax.random.randint(k_labels, (batch,), 0, num_classes, dtype=jnp.int32)

    # train=True path (random CFG label dropout)
    emb_train = jax.block_until_ready(embedder(labels, train=True, drop_key=k_drop))
    assert emb_train.shape == (batch, hidden_size)

    # eval path (no dropout) — must match a plain gather
    emb_eval = jax.block_until_ready(embedder(labels, train=False))
    ref = embedder.embedding_table[labels]
    assert emb_eval.shape == (batch, hidden_size)
    assert jnp.allclose(emb_eval, ref), "eval-path mismatch vs reference gather"

    # forced-drop path: all labels mapped to the CFG embedding row
    force = jnp.ones((batch,), dtype=jnp.int32)
    emb_forced = jax.block_until_ready(
        embedder(labels, train=False, force_drop_ids=force)
    )
    ref_forced = jnp.broadcast_to(
        embedder.embedding_table[num_classes], (batch, hidden_size)
    )
    assert jnp.allclose(emb_forced, ref_forced), "forced-drop mismatch"

    # Non-aligned shapes exercise the B/H padding path.
    embedder2 = LabelEmbedder(7, 72, 0.0, key=k_table)
    labels2 = jax.random.randint(k_drop, (5,), 0, 7, dtype=jnp.int32)
    emb2 = jax.block_until_ready(embedder2(labels2, train=False))
    assert emb2.shape == (5, 72)
    assert jnp.allclose(emb2, embedder2.embedding_table[labels2]), "padded-path mismatch"

    print("KERNEL_OK")
</pallas_src>

<mosaic_0001>
module attributes {stable_mosaic.version = 11 : i64} {
  func.func @_gather_kernel(%arg0: i32, %arg1: memref<8xi32, #tpu.memory_space<smem>>, %arg2: memref<11x128xf32, #tpu.memory_space<vmem>>, %arg3: memref<8x128xf32, #tpu.memory_space<vmem>>) attributes {dimension_semantics = [#tpu.dimension_semantics<parallel>], iteration_bounds = array<i64: 1>, scalar_prefetch = 1 : i64, scratch_operands = 0 : i64, tpu.core_type = #tpu.core_type<tc>, window_params = [{pipeline_mode = #tpu.pipeline_mode<synchronous>, transform_indices = @transform_0, window_bounds = array<i64: 11, 128>}, {transform_indices = @transform_1, window_bounds = array<i64: 8, 128>}]} {
    %c8_i32 = arith.constant 8 : i32
    %0 = arith.muli %arg0, %c8_i32 : i32
    %c0_i32 = arith.constant 0 : i32
    %c8_i32_0 = arith.constant 8 : i32
    %1 = arith.addi %c0_i32, %c8_i32_0 : i32
    %c1_i32 = arith.constant 1 : i32
    scf.for %arg4 = %c0_i32 to %1 step %c1_i32  : i32 {
      %2 = arith.addi %0, %arg4 : i32
      %3 = arith.index_cast %2 : i32 to index
      %4 = memref.load %arg1[%3] : memref<8xi32, #tpu.memory_space<smem>>
      %5 = arith.index_cast %4 : i32 to index
      %c0 = arith.constant 0 : index
      %6 = vector.load %arg2[%5, %c0] : memref<11x128xf32, #tpu.memory_space<vmem>>, vector<1x128xf32>
      %7 = arith.index_cast %arg4 : i32 to index
      %c0_2 = arith.constant 0 : index
      %8 = vector.load %arg3[%7, %c0_2] : memref<8x128xf32, #tpu.memory_space<vmem>>, vector<1x128xf32>
      tpu.vector_store %arg3[%7, %c0_2], %6 {strides = array<i32>} : memref<8x128xf32, #tpu.memory_space<vmem>>, vector<1x128xf32>,
    }
    %c8_i32_1 = arith.constant 8 : i32
    return
  }
  func.func @transform_0(%arg0: i32, %arg1: memref<8xi32, #tpu.memory_space<smem>>) -> (i32, i32) {
    %c0_i32 = arith.constant 0 : i32
    %c0_i32_0 = arith.constant 0 : i32
    %c0_i32_1 = arith.constant 0 : i32
    return %c0_i32, %c0_i32_0 : i32, i32
  }
  func.func @transform_1(%arg0: i32, %arg1: memref<8xi32, #tpu.memory_space<smem>>) -> (i32, i32) {
    %c0_i32 = arith.constant 0 : i32
    %c0_i32_0 = arith.constant 0 : i32
    return %arg0, %c0_i32 : i32, i32
  }
}

</mosaic_0001>

<llo_original>
// kernel: tpu_custom_call.1
$region0: #{tpu_custom_call.1}
  #allocation0 [shape = 'u32[]', space=smem, size = 0x4, offset = 0x4, fixed_abs, tag = 'smem constant byte address 0x4 - core index']
  #allocation1 [shape = 'u32[144,128]{1,0:T(1,128)}', space=vmem, size = 0x12000, scoped, tag = 'internal scratch']
  #allocation2 [shape = 's32[1]{0}', space=sflag, size = 0x4, scoped, tag = 'scoped memory for tpu_custom_call.1']
  #allocation3 [shape = 'u8[512]{0}', space=smem, size = 0x200, scoped, tag = 'prefetched SMEM operand 0']
  %s0 = inlined_call_operand.hbm [shape: s32[8], index: 0, kind: input, shape index: {}]
  %s1 = inlined_call_operand.hbm [shape: f32[11,128], index: 1, kind: input, shape index: {}]
  %s2 = inlined_call_operand.hbm [shape: f32[8,128], index: 2, kind: output, shape index: {}]
  %s3 = sld [smem:[#allocation0]]
  $region25: #{tpu_custom_call.1} parent=0
    _
  %s5 = ssub.s32 1, %s3
  %s6 = scalar_select 0, %s5, %s3
  %8 = dma.hbm_to_smem %s0, 16, [#allocation3], [#allocation2]
  %9 = dma.done [#allocation2], 16
  %10 = sfence
  $region1: #{tpu_custom_call.1} parent=0
    #allocation4 [shape = 'u8[8192]{0}', space=vmem, size = 0x2000, scoped, tag = 'input window, operand 1, single buffered']
    #allocation5 [shape = 's32[1]{0}', space=sflag, size = 0x4, scoped, tag = 'scoped memory for tpu_custom_call.1']
    #allocation6 [shape = 's32[1]{0}', space=sflag, size = 0x4, scoped, tag = 'scoped memory for tpu_custom_call.1']
    #allocation7 [shape = 'u8[4096]{0}', space=vmem, size = 0x1000, scoped, tag = 'output window, operand 0, single buffered']
    %11 = vsyncpa [#allocation5], 0
    %12 = vsyncpa [#allocation6], 0
    // Predicated region
    $region2: #{tpu_custom_call.1} parent=1 // pred_check
      _
    $region3: #{tpu_custom_call.1} parent=1 // pred_check_branch
      %14 = sbr.rel (0) target = $region5
    $region4: #{tpu_custom_call.1} parent=1 // pred_region
      %s16 = ssub.s32 256, 256
      %17 = vsyncadd [#allocation5], %s16
      %s18 = sshll.u32 [#allocation4], 4
      %s19 = int_to_ptr.vmem [resolvable:$true] %s18
      %24 = dma.hbm_to_vmem [thread:$0]  %s1, 256, %s19, [#allocation5], 128, 128, 8
    $region5: #{tpu_custom_call.1} parent=1 // pred_fallthru
      _
    // Predicated region
    $region6: #{tpu_custom_call.1} parent=1 // pred_check
      _
    $region7: #{tpu_custom_call.1} parent=1 // pred_check_branch
      %26 = sbr.rel (0) target = $region9
    $region8: #{tpu_custom_call.1} parent=1 // pred_region
      %27 = dma.done [#allocation5], 256
    $region9: #{tpu_custom_call.1} parent=1 // pred_fallthru
      _
    %s28 = smul.u32 0, 8
    loop: start=0, step=1, limit=8
    $region10: #{tpu_custom_call.1} parent=1 // loop_pre_header
      _
    $region11: #{tpu_custom_call.1} parent=1 // loop_header
      %s30 = sphi 0, %s34
      %p31 = scmp.ge.s32.totalorder %s30, 8
    $region12: #{tpu_custom_call.1} parent=1 // loop_header_branch
      %33 = sbr.rel (%p31) target = $region16
    $region13: #{tpu_custom_call.1} parent=1 // loop_body
      %s35 = sadd.s32 %s28, %s30
      %s36 = sld [smem:[#allocation3 + %s35]]
      %s37 = scalar_lea.vmem [#allocation4], %s36
      %v38 = vld [vmem:[%s37] sm:$0x1]
      %s39 = scalar_lea.vmem [#allocation7], %s30
      %40 = vst [vmem:[%s39] sm:$0x1] %v38
    $region14: #{tpu_custom_call.1} parent=1 // loop_footer
      %s34 = sadd.s32 1, %s30
    $region15: #{tpu_custom_call.1} parent=1 // loop_footer_branch
      %29 = sbr.rel target = $region11
    $region16: #{tpu_custom_call.1} parent=1 // loop_exit
      _
    // Predicated region
    $region17: #{tpu_custom_call.1} parent=1 // pred_check
      _
    $region18: #{tpu_custom_call.1} parent=1 // pred_check_branch
      %42 = sbr.rel (0) target = $region20
    $region19: #{tpu_custom_call.1} parent=1 // pred_region
      %s44 = ssub.s32 128, 128
      %45 = vsyncadd [#allocation6], %s44
      %s47 = sshll.u32 [#allocation7], 4
      %s48 = int_to_ptr.vmem [resolvable:$true] %s47
      %50 = dma.vmem_to_hbm [thread:$0]  %s48, 128, %s2, [#allocation6]
    $region20: #{tpu_custom_call.1} parent=1 // pred_fallthru
      _
    // Predicated region
    $region21: #{tpu_custom_call.1} parent=1 // pred_check
      _
    $region22: #{tpu_custom_call.1} parent=1 // pred_check_branch
      %52 = sbr.rel (0) target = $region24
    $region23: #{tpu_custom_call.1} parent=1 // pred_region
      %53 = dma.done [#allocation6], 128
    $region24: #{tpu_custom_call.1} parent=1 // pred_fallthru
      _
    %54 = vsyncpa [#allocation5], 1
    %55 = vsyncpa [#allocation6], 1

</llo_original>
